<compile_context>
chip_gen: v5e
topology: v5e:2x2
jax: 0.10.0
libtpu: 0.0.40
codegen_flags: <defaults>
</compile_context>

<pallas_src>
import math
import functools

import jax
import jax.numpy as jnp
from jax import lax
from jax.experimental import pallas as pl
from jax.experimental.pallas import tpu as pltpu


def make_gaussian_taps_1d(kernel_size: int, sigma: float):
    """Normalized 1D taps; outer(taps, taps) == the PyTorch 2D kernel."""
    mean = (kernel_size - 1) / 2.0
    g = [
        (1.0 / (sigma * math.sqrt(2.0 * math.pi)))
        * math.exp(-(((i - mean) / (2.0 * sigma)) ** 2))
        for i in range(kernel_size)
    ]
    s = sum(g)
    return tuple(float(v / s) for v in g)


def make_gaussian_weight(channels: int, kernel_size: int, sigma: float) -> jnp.ndarray:
    """Weight construction identical to the PyTorch __init__ (for reference check)."""
    coords = jnp.arange(kernel_size, dtype=jnp.float32)
    mean = (kernel_size - 1) / 2.0
    g = (1.0 / (sigma * math.sqrt(2.0 * math.pi))) * jnp.exp(
        -(((coords - mean) / (2.0 * sigma)) ** 2)
    )
    k2d = g[:, None] * g[None, :]
    k2d = k2d / jnp.sum(k2d)
    w = jnp.broadcast_to(k2d[None, None, :, :], (channels, 1, kernel_size, kernel_size))
    return w.astype(jnp.float32)


def _sym_conv1d(slice_at, taps, K):
    """sum_k taps[k] * slice_at(k), exploiting taps[k] == taps[K-1-k].

    Mirrored shifted slices are added before scaling (halves the multiplies),
    and partial terms are combined with a balanced tree so the VALU add
    dependency chain stays short (fills the 4 VALU slots).
    """
    terms = []
    for k in range(K // 2):
        terms.append(taps[k] * (slice_at(k) + slice_at(K - 1 - k)))
    if K % 2 == 1:
        c = K // 2
        terms.append(taps[c] * slice_at(c))
    while len(terms) > 1:
        nxt = [terms[i] + terms[i + 1] for i in range(0, len(terms) - 1, 2)]
        if len(terms) % 2:
            nxt.append(terms[-1])
        terms = nxt
    return terms[0]


def _gauss_sep_kernel(x_ref, o_ref, xw_ref, tmp_ref, *,
                      taps, K, H, W, Hp, Wp, Ho, Wo, P):
    # x_ref  : (BLK, H,  W )  unpadded input images for this grid step
    # o_ref  : (BLK, Ho, Wo)  output images
    # xw_ref : (BLK, H,  Wp)  VMEM scratch = W-padded input (padding fused)
    # tmp_ref: (BLK, Hp, Wo)  VMEM scratch = result of the W-pass (+ H zero bands)

    # ---- fused zero padding along W only ----
    xw_ref[...] = jnp.zeros_like(xw_ref)
    xw_ref[:, :, P:P + W] = x_ref[...].astype(jnp.float32)

    # ---- pass 1: 1D conv along W, computed only for the H interior rows ----
    # The top/bottom padding rows are all-zero and stay zero under a W-only
    # conv, so they are just left as zeros in tmp_ref instead of convolved.
    tmp_ref[...] = jnp.zeros_like(tmp_ref)
    tmp_ref[:, P:P + H, :] = _sym_conv1d(
        lambda k: xw_ref[:, :, k:k + Wo], taps, K)

    # ---- pass 2: 1D conv along H (sublane-offset slice loads) ----
    o_ref[...] = _sym_conv1d(
        lambda k: tmp_ref[:, k:k + Ho, :], taps, K).astype(o_ref.dtype)


def gaussian_smoothing(x: jnp.ndarray, *, kernel_size: int = 11,
                       sigma: float = 2.5, padding: int = 5) -> jnp.ndarray:
    """Depthwise 2D Gaussian blur (groups = channels), NCHW layout."""
    N, C, H, W = x.shape
    K = int(kernel_size)
    assert K >= 2
    P = int(padding)
    taps = make_gaussian_taps_1d(K, float(sigma))

    Hp, Wp = H + 2 * P, W + 2 * P
    Ho, Wo = Hp - K + 1, Wp - K + 1

    B = N * C
    x2 = x.reshape(B, H, W)  # free wrapper-side reshape: collapse (N, C)

    # 2 parallel grid steps: shards across v7x's 2 TensorCores and keeps
    # per-step pipeline overhead low; no-op knob on single-TC v5e/v6e.
    n_steps = 2 if (B % 2 == 0 and B >= 2) else 1
    BLK = B // n_steps

    kernel = functools.partial(
        _gauss_sep_kernel, taps=taps, K=K,
        H=H, W=W, Hp=Hp, Wp=Wp, Ho=Ho, Wo=Wo, P=P)

    out2 = pl.pallas_call(
        kernel,
        out_shape=jax.ShapeDtypeStruct((B, Ho, Wo), x.dtype),
        grid_spec=pltpu.PrefetchScalarGridSpec(
            num_scalar_prefetch=0,
            grid=(n_steps,),
            in_specs=[
                # last two dims equal the full array dims -> valid block
                pl.BlockSpec((BLK, H, W), lambda i: (i, 0, 0)),
            ],
            out_specs=pl.BlockSpec((BLK, Ho, Wo), lambda i: (i, 0, 0)),
            scratch_shapes=[
                pltpu.VMEM((BLK, H, Wp), jnp.float32),   # W-padded input
                pltpu.VMEM((BLK, Hp, Wo), jnp.float32),  # after W-pass
            ],
        ),
        compiler_params=pltpu.CompilerParams(
            dimension_semantics=("parallel",)),
    )(x2)

    return out2.reshape(N, C, Ho, Wo)


def _reference(x, weight, padding=5):
    """Pure-JAX reference (lax depthwise conv) for correctness checking."""
    C = x.shape[1]
    return lax.conv_general_dilated(
        x, weight,
        window_strides=(1, 1),
        padding=[(padding, padding), (padding, padding)],
        dimension_numbers=("NCHW", "OIHW", "NCHW"),
        feature_group_count=C,
        precision=lax.Precision.HIGHEST,
    )


if __name__ == "__main__":
    # Module config: channels=4, kernel_size=11, sigma=2.5, dim=2, padding=5
    channels, kernel_size, sigma, padding = 4, 11, 2.5, 5

    key = jax.random.PRNGKey(0)
    x = jax.random.normal(key, (2, channels, 16, 16), dtype=jnp.float32)

    out = gaussian_smoothing(x, kernel_size=kernel_size, sigma=sigma, padding=padding)
    out = jax.block_until_ready(out)

    weight = make_gaussian_weight(channels, kernel_size, sigma)
    ref = _reference(x, weight, padding=padding)
    assert out.shape == ref.shape, (out.shape, ref.shape)
    err = float(jnp.max(jnp.abs(out - ref)))
    assert err < 1e-5, err

    print("KERNEL_OK")
</pallas_src>

<mosaic_0001>
module attributes {stable_mosaic.version = 11 : i64} {
  func.func @_gauss_sep_kernel(%arg0: i32, %arg1: memref<4x16x16xf32, #tpu.memory_space<vmem>>, %arg2: memref<4x16x16xf32, #tpu.memory_space<vmem>>, %arg3: memref<4x16x26xf32, #tpu.memory_space<vmem>>, %arg4: memref<4x26x16xf32, #tpu.memory_space<vmem>>) attributes {dimension_semantics = [#tpu.dimension_semantics<parallel>], iteration_bounds = array<i64: 2>, scalar_prefetch = 0 : i64, scratch_operands = 2 : i64, tpu.core_type = #tpu.core_type<tc>, window_params = [{transform_indices = @transform_0, window_bounds = array<i64: 4, 16, 16>}, {transform_indices = @transform_1, window_bounds = array<i64: 4, 16, 16>}]} {
    %cst = arith.constant 0.000000e+00 : f32
    %0 = vector.broadcast %cst : f32 to vector<4x16x26xf32>
    %c0 = arith.constant 0 : index
    %c0_0 = arith.constant 0 : index
    %c0_1 = arith.constant 0 : index
    %1 = vector.load %arg3[%c0, %c0_0, %c0_1] : memref<4x16x26xf32, #tpu.memory_space<vmem>>, vector<4x16x26xf32>
    tpu.vector_store %arg3[%c0, %c0_0, %c0_1], %0 {strides = array<i32>} : memref<4x16x26xf32, #tpu.memory_space<vmem>>, vector<4x16x26xf32>,
    %c0_2 = arith.constant 0 : index
    %c0_3 = arith.constant 0 : index
    %c0_4 = arith.constant 0 : index
    %2 = vector.load %arg1[%c0_2, %c0_3, %c0_4] : memref<4x16x16xf32, #tpu.memory_space<vmem>>, vector<4x16x16xf32>
    %c0_5 = arith.constant 0 : index
    %c0_6 = arith.constant 0 : index
    %c5 = arith.constant 5 : index
    %3 = vector.load %arg3[%c0_5, %c0_6, %c5] : memref<4x16x26xf32, #tpu.memory_space<vmem>>, vector<4x16x16xf32>
    tpu.vector_store %arg3[%c0_5, %c0_6, %c5], %2 {strides = array<i32>} : memref<4x16x26xf32, #tpu.memory_space<vmem>>, vector<4x16x16xf32>,
    %cst_7 = arith.constant 0.000000e+00 : f32
    %4 = vector.broadcast %cst_7 : f32 to vector<4x26x16xf32>
    %c0_8 = arith.constant 0 : index
    %c0_9 = arith.constant 0 : index
    %c0_10 = arith.constant 0 : index
    %5 = vector.load %arg4[%c0_8, %c0_9, %c0_10] : memref<4x26x16xf32, #tpu.memory_space<vmem>>, vector<4x26x16xf32>
    tpu.vector_store %arg4[%c0_8, %c0_9, %c0_10], %4 {strides = array<i32>} : memref<4x26x16xf32, #tpu.memory_space<vmem>>, vector<4x26x16xf32>,
    %c0_11 = arith.constant 0 : index
    %c0_12 = arith.constant 0 : index
    %c0_13 = arith.constant 0 : index
    %6 = vector.load %arg3[%c0_11, %c0_12, %c0_13] : memref<4x16x26xf32, #tpu.memory_space<vmem>>, vector<4x16x16xf32>
    %c0_14 = arith.constant 0 : index
    %c0_15 = arith.constant 0 : index
    %c10 = arith.constant 10 : index
    %7 = vector.load %arg3[%c0_14, %c0_15, %c10] : memref<4x16x26xf32, #tpu.memory_space<vmem>>, vector<4x16x16xf32>
    %8 = arith.addf %6, %7 : vector<4x16x16xf32>
    %cst_16 = arith.constant 0.0470942184 : f32
    %9 = vector.broadcast %cst_16 : f32 to vector<4x16x16xf32>
    %10 = arith.mulf %9, %8 : vector<4x16x16xf32>
    %c0_17 = arith.constant 0 : index
    %c0_18 = arith.constant 0 : index
    %c1 = arith.constant 1 : index
    %11 = vector.load %arg3[%c0_17, %c0_18, %c1] : memref<4x16x26xf32, #tpu.memory_space<vmem>>, vector<4x16x16xf32>
    %c0_19 = arith.constant 0 : index
    %c0_20 = arith.constant 0 : index
    %c9 = arith.constant 9 : index
    %12 = vector.load %arg3[%c0_19, %c0_20, %c9] : memref<4x16x26xf32, #tpu.memory_space<vmem>>, vector<4x16x16xf32>
    %13 = arith.addf %11, %12 : vector<4x16x16xf32>
    %cst_21 = arith.constant 0.0675015301 : f32
    %14 = vector.broadcast %cst_21 : f32 to vector<4x16x16xf32>
    %15 = arith.mulf %14, %13 : vector<4x16x16xf32>
    %c0_22 = arith.constant 0 : index
    %c0_23 = arith.constant 0 : index
    %c2 = arith.constant 2 : index
    %16 = vector.load %arg3[%c0_22, %c0_23, %c2] : memref<4x16x26xf32, #tpu.memory_space<vmem>>, vector<4x16x16xf32>
    %c0_24 = arith.constant 0 : index
    %c0_25 = arith.constant 0 : index
    %c8 = arith.constant 8 : index
    %17 = vector.load %arg3[%c0_24, %c0_25, %c8] : memref<4x16x26xf32, #tpu.memory_space<vmem>>, vector<4x16x16xf32>
    %18 = arith.addf %16, %17 : vector<4x16x16xf32>
    %cst_26 = arith.constant 0.0893132836 : f32
    %19 = vector.broadcast %cst_26 : f32 to vector<4x16x16xf32>
    %20 = arith.mulf %19, %18 : vector<4x16x16xf32>
    %c0_27 = arith.constant 0 : index
    %c0_28 = arith.constant 0 : index
    %c3 = arith.constant 3 : index
    %21 = vector.load %arg3[%c0_27, %c0_28, %c3] : memref<4x16x26xf32, #tpu.memory_space<vmem>>, vector<4x16x16xf32>
    %c0_29 = arith.constant 0 : index
    %c0_30 = arith.constant 0 : index
    %c7 = arith.constant 7 : index
    %22 = vector.load %arg3[%c0_29, %c0_30, %c7] : memref<4x16x26xf32, #tpu.memory_space<vmem>>, vector<4x16x16xf32>
    %23 = arith.addf %21, %22 : vector<4x16x16xf32>
    %cst_31 = arith.constant 0.10908749 : f32
    %24 = vector.broadcast %cst_31 : f32 to vector<4x16x16xf32>
    %25 = arith.mulf %24, %23 : vector<4x16x16xf32>
    %c0_32 = arith.constant 0 : index
    %c0_33 = arith.constant 0 : index
    %c4 = arith.constant 4 : index
    %26 = vector.load %arg3[%c0_32, %c0_33, %c4] : memref<4x16x26xf32, #tpu.memory_space<vmem>>, vector<4x16x16xf32>
    %c0_34 = arith.constant 0 : index
    %c0_35 = arith.constant 0 : index
    %c6 = arith.constant 6 : index
    %27 = vector.load %arg3[%c0_34, %c0_35, %c6] : memref<4x16x26xf32, #tpu.memory_space<vmem>>, vector<4x16x16xf32>
    %28 = arith.addf %26, %27 : vector<4x16x16xf32>
    %cst_36 = arith.constant 0.122995801 : f32
    %29 = vector.broadcast %cst_36 : f32 to vector<4x16x16xf32>
    %30 = arith.mulf %29, %28 : vector<4x16x16xf32>
    %c0_37 = arith.constant 0 : index
    %c0_38 = arith.constant 0 : index
    %c5_39 = arith.constant 5 : index
    %31 = vector.load %arg3[%c0_37, %c0_38, %c5_39] : memref<4x16x26xf32, #tpu.memory_space<vmem>>, vector<4x16x16xf32>
    %cst_40 = arith.constant 0.128015354 : f32
    %32 = vector.broadcast %cst_40 : f32 to vector<4x16x16xf32>
    %33 = arith.mulf %32, %31 : vector<4x16x16xf32>
    %34 = arith.addf %10, %15 : vector<4x16x16xf32>
    %35 = arith.addf %20, %25 : vector<4x16x16xf32>
    %36 = arith.addf %30, %33 : vector<4x16x16xf32>
    %37 = arith.addf %34, %35 : vector<4x16x16xf32>
    %38 = arith.addf %37, %36 : vector<4x16x16xf32>
    %c0_41 = arith.constant 0 : index
    %c5_42 = arith.constant 5 : index
    %c0_43 = arith.constant 0 : index
    %39 = vector.load %arg4[%c0_41, %c5_42, %c0_43] : memref<4x26x16xf32, #tpu.memory_space<vmem>>, vector<4x16x16xf32>
    tpu.vector_store %arg4[%c0_41, %c5_42, %c0_43], %38 {strides = array<i32>} : memref<4x26x16xf32, #tpu.memory_space<vmem>>, vector<4x16x16xf32>,
    %c0_44 = arith.constant 0 : index
    %c0_45 = arith.constant 0 : index
    %c0_46 = arith.constant 0 : index
    %40 = vector.load %arg4[%c0_44, %c0_45, %c0_46] : memref<4x26x16xf32, #tpu.memory_space<vmem>>, vector<4x16x16xf32>
    %c0_47 = arith.constant 0 : index
    %c10_48 = arith.constant 10 : index
    %c0_49 = arith.constant 0 : index
    %41 = vector.load %arg4[%c0_47, %c10_48, %c0_49] : memref<4x26x16xf32, #tpu.memory_space<vmem>>, vector<4x16x16xf32>
    %42 = arith.addf %40, %41 : vector<4x16x16xf32>
    %cst_50 = arith.constant 0.0470942184 : f32
    %43 = vector.broadcast %cst_50 : f32 to vector<4x16x16xf32>
    %44 = arith.mulf %43, %42 : vector<4x16x16xf32>
    %c0_51 = arith.constant 0 : index
    %c1_52 = arith.constant 1 : index
    %c0_53 = arith.constant 0 : index
    %45 = vector.load %arg4[%c0_51, %c1_52, %c0_53] : memref<4x26x16xf32, #tpu.memory_space<vmem>>, vector<4x16x16xf32>
    %c0_54 = arith.constant 0 : index
    %c9_55 = arith.constant 9 : index
    %c0_56 = arith.constant 0 : index
    %46 = vector.load %arg4[%c0_54, %c9_55, %c0_56] : memref<4x26x16xf32, #tpu.memory_space<vmem>>, vector<4x16x16xf32>
    %47 = arith.addf %45, %46 : vector<4x16x16xf32>
    %cst_57 = arith.constant 0.0675015301 : f32
    %48 = vector.broadcast %cst_57 : f32 to vector<4x16x16xf32>
    %49 = arith.mulf %48, %47 : vector<4x16x16xf32>
    %c0_58 = arith.constant 0 : index
    %c2_59 = arith.constant 2 : index
    %c0_60 = arith.constant 0 : index
    %50 = vector.load %arg4[%c0_58, %c2_59, %c0_60] : memref<4x26x16xf32, #tpu.memory_space<vmem>>, vector<4x16x16xf32>
    %c0_61 = arith.constant 0 : index
    %c8_62 = arith.constant 8 : index
    %c0_63 = arith.constant 0 : index
    %51 = vector.load %arg4[%c0_61, %c8_62, %c0_63] : memref<4x26x16xf32, #tpu.memory_space<vmem>>, vector<4x16x16xf32>
    %52 = arith.addf %50, %51 : vector<4x16x16xf32>
    %cst_64 = arith.constant 0.0893132836 : f32
    %53 = vector.broadcast %cst_64 : f32 to vector<4x16x16xf32>
    %54 = arith.mulf %53, %52 : vector<4x16x16xf32>
    %c0_65 = arith.constant 0 : index
    %c3_66 = arith.constant 3 : index
    %c0_67 = arith.constant 0 : index
    %55 = vector.load %arg4[%c0_65, %c3_66, %c0_67] : memref<4x26x16xf32, #tpu.memory_space<vmem>>, vector<4x16x16xf32>
    %c0_68 = arith.constant 0 : index
    %c7_69 = arith.constant 7 : index
    %c0_70 = arith.constant 0 : index
    %56 = vector.load %arg4[%c0_68, %c7_69, %c0_70] : memref<4x26x16xf32, #tpu.memory_space<vmem>>, vector<4x16x16xf32>
    %57 = arith.addf %55, %56 : vector<4x16x16xf32>
    %cst_71 = arith.constant 0.10908749 : f32
    %58 = vector.broadcast %cst_71 : f32 to vector<4x16x16xf32>
    %59 = arith.mulf %58, %57 : vector<4x16x16xf32>
    %c0_72 = arith.constant 0 : index
    %c4_73 = arith.constant 4 : index
    %c0_74 = arith.constant 0 : index
    %60 = vector.load %arg4[%c0_72, %c4_73, %c0_74] : memref<4x26x16xf32, #tpu.memory_space<vmem>>, vector<4x16x16xf32>
    %c0_75 = arith.constant 0 : index
    %c6_76 = arith.constant 6 : index
    %c0_77 = arith.constant 0 : index
    %61 = vector.load %arg4[%c0_75, %c6_76, %c0_77] : memref<4x26x16xf32, #tpu.memory_space<vmem>>, vector<4x16x16xf32>
    %62 = arith.addf %60, %61 : vector<4x16x16xf32>
    %cst_78 = arith.constant 0.122995801 : f32
    %63 = vector.broadcast %cst_78 : f32 to vector<4x16x16xf32>
    %64 = arith.mulf %63, %62 : vector<4x16x16xf32>
    %c0_79 = arith.constant 0 : index
    %c5_80 = arith.constant 5 : index
    %c0_81 = arith.constant 0 : index
    %65 = vector.load %arg4[%c0_79, %c5_80, %c0_81] : memref<4x26x16xf32, #tpu.memory_space<vmem>>, vector<4x16x16xf32>
    %cst_82 = arith.constant 0.128015354 : f32
    %66 = vector.broadcast %cst_82 : f32 to vector<4x16x16xf32>
    %67 = arith.mulf %66, %65 : vector<4x16x16xf32>
    %68 = arith.addf %44, %49 : vector<4x16x16xf32>
    %69 = arith.addf %54, %59 : vector<4x16x16xf32>
    %70 = arith.addf %64, %67 : vector<4x16x16xf32>
    %71 = arith.addf %68, %69 : vector<4x16x16xf32>
    %72 = arith.addf %71, %70 : vector<4x16x16xf32>
    %c0_83 = arith.constant 0 : index
    %c0_84 = arith.constant 0 : index
    %c0_85 = arith.constant 0 : index
    %73 = vector.load %arg2[%c0_83, %c0_84, %c0_85] : memref<4x16x16xf32, #tpu.memory_space<vmem>>, vector<4x16x16xf32>
    tpu.vector_store %arg2[%c0_83, %c0_84, %c0_85], %72 {strides = array<i32>} : memref<4x16x16xf32, #tpu.memory_space<vmem>>, vector<4x16x16xf32>,
    return
  }
  func.func @transform_0(%arg0: i32) -> (i32, i32, i32) {
    %c0_i32 = arith.constant 0 : i32
    %c0_i32_0 = arith.constant 0 : i32
    %c0_i32_1 = arith.constant 0 : i32
    return %arg0, %c0_i32, %c0_i32_0 : i32, i32, i32
  }
  func.func @transform_1(%arg0: i32) -> (i32, i32, i32) {
    %c0_i32 = arith.constant 0 : i32
    %c0_i32_0 = arith.constant 0 : i32
    %c0_i32_1 = arith.constant 0 : i32
    return %arg0, %c0_i32, %c0_i32_0 : i32, i32, i32
  }
}

</mosaic_0001>

<llo_original>
// kernel: tpu_custom_call.1
$region0: #{tpu_custom_call.1}
  #allocation0 [shape = 'u32[]', space=smem, size = 0x4, offset = 0x4, fixed_abs, tag = 'smem constant byte address 0x4 - core index']
  #allocation1 [shape = 'u32[72,128]{1,0:T(1,128)}', space=vmem, size = 0x9000, scoped, tag = 'internal scratch']
  #allocation2 [shape = 'f32[4,16,26]{2,1,0:T(8,128)}', space=vmem, size = 0x8000, scoped, tag = 'scratch operand']
  #allocation3 [shape = 'f32[4,26,16]{2,1,0:T(8,128)}', space=vmem, size = 0x10000, scoped, tag = 'scratch operand']
  %s0 = inlined_call_operand.hbm [shape: f32[8,16,16], index: 0, kind: input, shape index: {}]
  %s1 = inlined_call_operand.hbm [shape: f32[8,16,16], index: 1, kind: output, shape index: {}]
  %s2 = sld [smem:[#allocation0]]
  $region41: #{tpu_custom_call.1} parent=0
    _
  %s4 = ssub.s32 1, %s2
  %s5 = scalar_select 0, %s4, %s2
  $region1: #{tpu_custom_call.1} parent=0
    #allocation4 [shape = 'u8[65536]{0}', space=vmem, size = 0x10000, scoped, tag = 'input window, operand 0']
    #allocation5 [shape = 's32[2]{0}', space=sflag, size = 0x8, scoped, tag = 'scoped memory for tpu_custom_call.1']
    #allocation6 [shape = 's32[2]{0}', space=sflag, size = 0x8, scoped, tag = 'scoped memory for tpu_custom_call.1']
    #allocation7 [shape = 'u8[65536]{0}', space=vmem, size = 0x10000, scoped, tag = 'output window, operand 0']
    %6 = vsyncpa [#allocation5], 0
    %s7 = scalar_lea.sflag [#allocation5], 1
    %8 = vsyncpa %s7, 0
    %9 = vsyncpa [#allocation6], 0
    %s10 = scalar_lea.sflag [#allocation6], 1
    %11 = vsyncpa %s10, 0
    loop: start=0, step=1, limit=4
    $region2: #{tpu_custom_call.1} parent=1 // loop_pre_header
      _
    $region3: #{tpu_custom_call.1} parent=1 // loop_header
      %s13 = sphi 0, %s17
      %p14 = scmp.ge.s32.totalorder %s13, 4
      %s23 = sphi 0, %s25
      %s26 = sphi 0, %s23
      %s27 = sphi 0, %s26
      %s43 = sphi 0, %s27
      %s49 = sphi 0, %s51
      %s52 = sphi 0, %s49
      %s53 = sphi 0, %s52
      %s69 = sphi 0, %s53
    $region4: #{tpu_custom_call.1} parent=1 // loop_header_branch
      %16 = sbr.rel (%p14) target = $region8
    $region5: #{tpu_custom_call.1} parent=1 // loop_body
      %s18 = ssub.s32 %s13, 1
      %s19 = ssub.s32 %s13, 2
      %s20 = sadd.s32 %s13, 1
      %s21 = ssub.s32 %s13, %s20
      %p22 = scmp.eq.s32.totalorder %s21, 0
      %s24 = sadd.s32 %s23, 1
      %s25 = scalar_select %p22, %s23, %s24
      %p28 = pneg %p22
      %p29 = scmp.eq.s32.totalorder %s13, 1
      %p30 = por %p28, %p29
      %p31 = scmp.ne.s32.totalorder %s23, %s26
      %p32 = scmp.eq.s32.totalorder %s13, 0
      %p33 = por %p31, %p32
      %p34 = scmp.ne.s32.totalorder %s23, %s26
      %p35 = scmp.eq.s32.totalorder %s18, 1
      %p36 = por %p34, %p35
      %p37 = scmp.ne.s32.totalorder %s26, %s27
      %p38 = scmp.eq.s32.totalorder %s18, 0
      %p39 = por %p37, %p38
      %p40 = scmp.ne.s32.totalorder %s26, %s27
      %p41 = scmp.eq.s32.totalorder %s19, 1
      %p42 = por %p40, %p41
      %p44 = scmp.ne.s32.totalorder %s27, %s43
      %p45 = scmp.eq.s32.totalorder %s19, 0
      %p46 = por %p44, %p45
      %s47 = ssub.s32 %s13, %s20
      %p48 = scmp.eq.s32.totalorder %s47, 0
      %s50 = sadd.s32 %s49, 1
      %s51 = scalar_select %p48, %s49, %s50
      %p54 = pneg %p48
      %p55 = scmp.eq.s32.totalorder %s13, 1
      %p56 = por %p54, %p55
      %p57 = scmp.ne.s32.totalorder %s49, %s52
      %p58 = scmp.eq.s32.totalorder %s13, 0
      %p59 = por %p57, %p58
      %p60 = scmp.ne.s32.totalorder %s49, %s52
      %p61 = scmp.eq.s32.totalorder %s18, 1
      %p62 = por %p60, %p61
      %p63 = scmp.ne.s32.totalorder %s52, %s53
      %p64 = scmp.eq.s32.totalorder %s18, 0
      %p65 = por %p63, %p64
      %p66 = scmp.ne.s32.totalorder %s52, %s53
      %p67 = scmp.eq.s32.totalorder %s19, 1
      %p68 = por %p66, %p67
      %p70 = scmp.ne.s32.totalorder %s53, %s69
      %p71 = scmp.eq.s32.totalorder %s19, 0
      %p72 = por %p70, %p71
      %p73 = scmp.le.s32.totalorder 1, %s13
      %p74 = scmp.lt.s32.totalorder %s13, 3
      %p75 = pnand %p73, %p74
      %p76 = pneg %p75
      // Predicated region
      $region9: #{tpu_custom_call.1} parent=5 // pred_check
        _
      $region10: #{tpu_custom_call.1} parent=5 // pred_check_branch
        %78 = sbr.rel (%p75) target = $region12
      $region11: #{tpu_custom_call.1} parent=5 // pred_region
        %s79 = ssub.s32 %s13, 1
      $region12: #{tpu_custom_call.1} parent=5 // pred_fallthru
        _
      %p80 = scmp.lt.s32.totalorder %s13, 2
      // Predicated region
      $region13: #{tpu_custom_call.1} parent=5 // pred_check
        %p81 = pneg %p80
      $region14: #{tpu_custom_call.1} parent=5 // pred_check_branch
        %83 = sbr.rel (%p81) target = $region16
      $region15: #{tpu_custom_call.1} parent=5 // pred_region
        // Predicated region
        $region17: #{tpu_custom_call.1} parent=15 // pred_check
          %p84 = pneg %p33
        $region18: #{tpu_custom_call.1} parent=15 // pred_check_branch
          %86 = sbr.rel (%p84) target = $region20
        $region19: #{tpu_custom_call.1} parent=15 // pred_region
          %s87 = sand.u32 %s23, 1
          %s88 = scalar_lea.sflag [#allocation5], %s87
          %s89 = sand.u32 %s23, 1
          %s90 = smul.addr %s89, 64
          %s91 = scalar_lea.vmem [#allocation4], %s90
          %s92 = smul.u32 4, %s13
          %94 = vsyncadd %s88, 0
          %s95 = smul.addr %s92, 2
          %s96 = smul.addr %s95, 8
          %s97 = scalar_lea.hbm %s0, %s96
          %s98 = sshll.u32 %s97, 4
          %s99 = int_to_ptr.hbm [resolvable:$true] %s98
          %s100 = sshll.u32 %s91, 4
          %s101 = int_to_ptr.vmem [resolvable:$true] %s100
          %106 = dma.hbm_to_vmem [thread:$0]  %s99, 1024, %s101, %s88, 128, 128, 8
        $region20: #{tpu_custom_call.1} parent=15 // pred_fallthru
          _
      $region16: #{tpu_custom_call.1} parent=5 // pred_fallthru
        _
      %p107 = scmp.le.s32.totalorder 1, %s13
      %p108 = scmp.lt.s32.totalorder %s13, 3
      %p109 = pnand %p107, %p108
      %p110 = pneg %p109
      // Predicated region
      $region21: #{tpu_custom_call.1} parent=5 // pred_check
        _
      $region22: #{tpu_custom_call.1} parent=5 // pred_check_branch
        %112 = sbr.rel (%p109) target = $region24
      $region23: #{tpu_custom_call.1} parent=5 // pred_region
        %s113 = ssub.s32 %s13, 1
        %s114 = sand.u32 %s26, 1
        %s115 = scalar_lea.sflag [#allocation5], %s114
        %s116 = sand.u32 %s26, 1
        %s117 = smul.addr %s116, 64
        %s118 = scalar_lea.vmem [#allocation4], %s117
        // Predicated region
        $region25: #{tpu_custom_call.1} parent=23 // pred_check
          %p119 = pneg %p39
        $region26: #{tpu_custom_call.1} parent=23 // pred_check_branch
          %121 = sbr.rel (%p119) target = $region28
        $region27: #{tpu_custom_call.1} parent=23 // pred_region
          %123 = dma.done %s115, 1024
        $region28: #{tpu_custom_call.1} parent=23 // pred_fallthru
          _
        %s124 = sand.u32 %s26, 1
        %s125 = scalar_lea.sflag [#allocation5], %s124
        %s126 = sand.u32 %s26, 1
        %s127 = smul.addr %s126, 64
        %s128 = scalar_lea.vmem [#allocation4], %s127
        %p129 = pneg %p39
        %p130 = pneg %p36
        %p131 = pneg %p65
        %p132 = pneg %p62
        %s133 = sand.u32 %s52, 1
        %s134 = scalar_lea.sflag [#allocation6], %s133
        %s135 = sand.u32 %s52, 1
        %s136 = smul.addr %s135, 64
        %s137 = scalar_lea.vmem [#allocation7], %s136
        %s138 = smul.u32 4, %s18
        %s139 = smul.u32 4, %s18
        %vm140 = vcmask 211968
        %141 = vst.msk [vmem:[#allocation2] sm:$0xff] %vm140, 0.0
        %142 = vst.msk [vmem:[#allocation2 + $0x8] sm:$0xff] %vm140, 0.0
        %143 = vst.msk [vmem:[#allocation2 + $0x10] sm:$0xff] %vm140, 0.0
        %144 = vst.msk [vmem:[#allocation2 + $0x18] sm:$0xff] %vm140, 0.0
        %145 = vst.msk [vmem:[#allocation2 + $0x20] sm:$0xff] %vm140, 0.0
        %146 = vst.msk [vmem:[#allocation2 + $0x28] sm:$0xff] %vm140, 0.0
        %147 = vst.msk [vmem:[#allocation2 + $0x30] sm:$0xff] %vm140, 0.0
        %148 = vst.msk [vmem:[#allocation2 + $0x38] sm:$0xff] %vm140, 0.0
        %v149 = vld [vmem:[%s118] sm:$0xff]
        %v150 = vld [vmem:[%s118 + $0x8] sm:$0xff]
        %v151 = vld [vmem:[%s118 + $0x10] sm:$0xff]
        %v152 = vld [vmem:[%s118 + $0x18] sm:$0xff]
        %v153 = vld [vmem:[%s118 + $0x20] sm:$0xff]
        %v154 = vld [vmem:[%s118 + $0x28] sm:$0xff]
        %v155 = vld [vmem:[%s118 + $0x30] sm:$0xff]
        %v156 = vld [vmem:[%s118 + $0x38] sm:$0xff]
        %165 = vrot.lane.b32.xlu0 %v149, 5
        %v166 = vpop.permute.xlu0 %165
        %167 = vrot.lane.b32.xlu0 %v150, 5
        %v168 = vpop.permute.xlu0 %167
        %169 = vrot.lane.b32.xlu0 %v151, 5
        %v170 = vpop.permute.xlu0 %169
        %171 = vrot.lane.b32.xlu0 %v152, 5
        %v172 = vpop.permute.xlu0 %171
        %173 = vrot.lane.b32.xlu0 %v153, 5
        %v174 = vpop.permute.xlu0 %173
        %175 = vrot.lane.b32.xlu0 %v154, 5
        %v176 = vpop.permute.xlu0 %175
        %177 = vrot.lane.b32.xlu0 %v155, 5
        %v178 = vpop.permute.xlu0 %177
        %179 = vrot.lane.b32.xlu0 %v156, 5
        %v180 = vpop.permute.xlu0 %179
        %vm189 = vcmask 171048
        %190 = vst.msk [vmem:[#allocation2] sm:$0xff] %vm189, %v166
        %191 = vst.msk [vmem:[#allocation2 + $0x8] sm:$0xff] %vm189, %v168
        %192 = vst.msk [vmem:[#allocation2 + $0x10] sm:$0xff] %vm189, %v170
        %193 = vst.msk [vmem:[#allocation2 + $0x18] sm:$0xff] %vm189, %v172
        %194 = vst.msk [vmem:[#allocation2 + $0x20] sm:$0xff] %vm189, %v174
        %195 = vst.msk [vmem:[#allocation2 + $0x28] sm:$0xff] %vm189, %v176
        %196 = vst.msk [vmem:[#allocation2 + $0x30] sm:$0xff] %vm189, %v178
        %197 = vst.msk [vmem:[#allocation2 + $0x38] sm:$0xff] %vm189, %v180
        %vm198 = vcmask 130048
        %199 = vst.msk [vmem:[#allocation3] sm:$0xff] %vm198, 0.0
        %200 = vst.msk [vmem:[#allocation3 + $0x8] sm:$0xff] %vm198, 0.0
        %201 = vst.msk [vmem:[#allocation3 + $0x10] sm:$0xff] %vm198, 0.0
        %vm202 = vcmask 123904
        %203 = vst.msk [vmem:[#allocation3 + $0x18] sm:$0x3] %vm202, 0.0
        %204 = vst.msk [vmem:[#allocation3 + $0x20] sm:$0xff] %vm198, 0.0
        %205 = vst.msk [vmem:[#allocation3 + $0x28] sm:$0xff] %vm198, 0.0
        %206 = vst.msk [vmem:[#allocation3 + $0x30] sm:$0xff] %vm198, 0.0
        %207 = vst.msk [vmem:[#allocation3 + $0x38] sm:$0x3] %vm202, 0.0
        %208 = vst.msk [vmem:[#allocation3 + $0x40] sm:$0xff] %vm198, 0.0
        %209 = vst.msk [vmem:[#allocation3 + $0x48] sm:$0xff] %vm198, 0.0
        %210 = vst.msk [vmem:[#allocation3 + $0x50] sm:$0xff] %vm198, 0.0
        %211 = vst.msk [vmem:[#allocation3 + $0x58] sm:$0x3] %vm202, 0.0
        %212 = vst.msk [vmem:[#allocation3 + $0x60] sm:$0xff] %vm198, 0.0
        %213 = vst.msk [vmem:[#allocation3 + $0x68] sm:$0xff] %vm198, 0.0
        %214 = vst.msk [vmem:[#allocation3 + $0x70] sm:$0xff] %vm198, 0.0
        %215 = vst.msk [vmem:[#allocation3 + $0x78] sm:$0x3] %vm202, 0.0
        %v216 = vld [vmem:[#allocation2] sm:$0xff]
        %v217 = vld [vmem:[#allocation2 + $0x8] sm:$0xff]
        %v218 = vld [vmem:[#allocation2 + $0x10] sm:$0xff]
        %v219 = vld [vmem:[#allocation2 + $0x18] sm:$0xff]
        %v220 = vld [vmem:[#allocation2 + $0x20] sm:$0xff]
        %v221 = vld [vmem:[#allocation2 + $0x28] sm:$0xff]
        %v222 = vld [vmem:[#allocation2 + $0x30] sm:$0xff]
        %v223 = vld [vmem:[#allocation2 + $0x38] sm:$0xff]
        %232 = vrot.lane.b32.xlu0 %v216, 118
        %v233 = vpop.permute.xlu0 %232
        %234 = vrot.lane.b32.xlu0 %v217, 118
        %v235 = vpop.permute.xlu0 %234
        %236 = vrot.lane.b32.xlu0 %v218, 118
        %v237 = vpop.permute.xlu0 %236
        %238 = vrot.lane.b32.xlu0 %v219, 118
        %v239 = vpop.permute.xlu0 %238
        %240 = vrot.lane.b32.xlu0 %v220, 118
        %v241 = vpop.permute.xlu0 %240
        %242 = vrot.lane.b32.xlu0 %v221, 118
        %v243 = vpop.permute.xlu0 %242
        %244 = vrot.lane.b32.xlu0 %v222, 118
        %v245 = vpop.permute.xlu0 %244
        %246 = vrot.lane.b32.xlu0 %v223, 118
        %v247 = vpop.permute.xlu0 %246
        %v256 = vadd.f32 %v216, %v233
        %v257 = vadd.f32 %v217, %v235
        %v258 = vadd.f32 %v218, %v237
        %v259 = vadd.f32 %v219, %v239
        %v260 = vadd.f32 %v220, %v241
        %v261 = vadd.f32 %v221, %v243
        %v262 = vadd.f32 %v222, %v245
        %v263 = vadd.f32 %v223, %v247
        %v264 = vmul.f32 %v256, 0.04709422
        %v265 = vmul.f32 %v257, 0.04709422
        %v266 = vmul.f32 %v258, 0.04709422
        %v267 = vmul.f32 %v259, 0.04709422
        %v268 = vmul.f32 %v260, 0.04709422
        %v269 = vmul.f32 %v261, 0.04709422
        %v270 = vmul.f32 %v262, 0.04709422
        %v271 = vmul.f32 %v263, 0.04709422
        %272 = vrot.lane.b32.xlu0 %v216, 120
        %v273 = vpop.permute.xlu0 %272
        %274 = vrot.lane.b32.xlu0 %v217, 120
        %v275 = vpop.permute.xlu0 %274
        %276 = vrot.lane.b32.xlu0 %v218, 120
        %v277 = vpop.permute.xlu0 %276
        %278 = vrot.lane.b32.xlu0 %v219, 120
        %v279 = vpop.permute.xlu0 %278
        %280 = vrot.lane.b32.xlu0 %v220, 120
        %v281 = vpop.permute.xlu0 %280
        %282 = vrot.lane.b32.xlu0 %v221, 120
        %v283 = vpop.permute.xlu0 %282
        %284 = vrot.lane.b32.xlu0 %v222, 120
        %v285 = vpop.permute.xlu0 %284
        %286 = vrot.lane.b32.xlu0 %v223, 120
        %v287 = vpop.permute.xlu0 %286
        %v296 = vadd.f32 %v216, %v273
        %v297 = vadd.f32 %v217, %v275
        %v298 = vadd.f32 %v218, %v277
        %v299 = vadd.f32 %v219, %v279
        %v300 = vadd.f32 %v220, %v281
        %v301 = vadd.f32 %v221, %v283
        %v302 = vadd.f32 %v222, %v285
        %v303 = vadd.f32 %v223, %v287
        %v304 = vmul.f32 %v296, 0.06750153
        %v305 = vmul.f32 %v297, 0.06750153
        %v306 = vmul.f32 %v298, 0.06750153
        %v307 = vmul.f32 %v299, 0.06750153
        %v308 = vmul.f32 %v300, 0.06750153
        %v309 = vmul.f32 %v301, 0.06750153
        %v310 = vmul.f32 %v302, 0.06750153
        %v311 = vmul.f32 %v303, 0.06750153
        %312 = vrot.lane.b32.xlu0 %v216, 122
        %v313 = vpop.permute.xlu0 %312
        %314 = vrot.lane.b32.xlu0 %v217, 122
        %v315 = vpop.permute.xlu0 %314
        %316 = vrot.lane.b32.xlu0 %v218, 122
        %v317 = vpop.permute.xlu0 %316
        %318 = vrot.lane.b32.xlu0 %v219, 122
        %v319 = vpop.permute.xlu0 %318
        %320 = vrot.lane.b32.xlu0 %v220, 122
        %v321 = vpop.permute.xlu0 %320
        %322 = vrot.lane.b32.xlu0 %v221, 122
        %v323 = vpop.permute.xlu0 %322
        %324 = vrot.lane.b32.xlu0 %v222, 122
        %v325 = vpop.permute.xlu0 %324
        %326 = vrot.lane.b32.xlu0 %v223, 122
        %v327 = vpop.permute.xlu0 %326
        %v336 = vadd.f32 %v216, %v313
        %v337 = vadd.f32 %v217, %v315
        %v338 = vadd.f32 %v218, %v317
        %v339 = vadd.f32 %v219, %v319
        %v340 = vadd.f32 %v220, %v321
        %v341 = vadd.f32 %v221, %v323
        %v342 = vadd.f32 %v222, %v325
        %v343 = vadd.f32 %v223, %v327
        %v344 = vmul.f32 %v336, 0.08931328
        %v345 = vmul.f32 %v337, 0.08931328
        %v346 = vmul.f32 %v338, 0.08931328
        %v347 = vmul.f32 %v339, 0.08931328
        %v348 = vmul.f32 %v340, 0.08931328
        %v349 = vmul.f32 %v341, 0.08931328
        %v350 = vmul.f32 %v342, 0.08931328
        %v351 = vmul.f32 %v343, 0.08931328
        %352 = vrot.lane.b32.xlu0 %v216, 124
        %v353 = vpop.permute.xlu0 %352
        %354 = vrot.lane.b32.xlu0 %v217, 124
        %v355 = vpop.permute.xlu0 %354
        %356 = vrot.lane.b32.xlu0 %v218, 124
        %v357 = vpop.permute.xlu0 %356
        %358 = vrot.lane.b32.xlu0 %v219, 124
        %v359 = vpop.permute.xlu0 %358
        %360 = vrot.lane.b32.xlu0 %v220, 124
        %v361 = vpop.permute.xlu0 %360
        %362 = vrot.lane.b32.xlu0 %v221, 124
        %v363 = vpop.permute.xlu0 %362
        %364 = vrot.lane.b32.xlu0 %v222, 124
        %v365 = vpop.permute.xlu0 %364
        %366 = vrot.lane.b32.xlu0 %v223, 124
        %v367 = vpop.permute.xlu0 %366
        %v376 = vadd.f32 %v216, %v353
        %v377 = vadd.f32 %v217, %v355
        %v378 = vadd.f32 %v218, %v357
        %v379 = vadd.f32 %v219, %v359
        %v380 = vadd.f32 %v220, %v361
        %v381 = vadd.f32 %v221, %v363
        %v382 = vadd.f32 %v222, %v365
        %v383 = vadd.f32 %v223, %v367
        %v384 = vmul.f32 %v376, 0.10908749
        %v385 = vmul.f32 %v377, 0.10908749
        %v386 = vmul.f32 %v378, 0.10908749
        %v387 = vmul.f32 %v379, 0.10908749
        %v388 = vmul.f32 %v380, 0.10908749
        %v389 = vmul.f32 %v381, 0.10908749
        %v390 = vmul.f32 %v382, 0.10908749
        %v391 = vmul.f32 %v383, 0.10908749
        %392 = vrot.lane.b32.xlu0 %v216, 126
        %v393 = vpop.permute.xlu0 %392
        %394 = vrot.lane.b32.xlu0 %v217, 126
        %v395 = vpop.permute.xlu0 %394
        %396 = vrot.lane.b32.xlu0 %v218, 126
        %v397 = vpop.permute.xlu0 %396
        %398 = vrot.lane.b32.xlu0 %v219, 126
        %v399 = vpop.permute.xlu0 %398
        %400 = vrot.lane.b32.xlu0 %v220, 126
        %v401 = vpop.permute.xlu0 %400
        %402 = vrot.lane.b32.xlu0 %v221, 126
        %v403 = vpop.permute.xlu0 %402
        %404 = vrot.lane.b32.xlu0 %v222, 126
        %v405 = vpop.permute.xlu0 %404
        %406 = vrot.lane.b32.xlu0 %v223, 126
        %v407 = vpop.permute.xlu0 %406
        %v416 = vadd.f32 %v216, %v393
        %v417 = vadd.f32 %v217, %v395
        %v418 = vadd.f32 %v218, %v397
        %v419 = vadd.f32 %v219, %v399
        %v420 = vadd.f32 %v220, %v401
        %v421 = vadd.f32 %v221, %v403
        %v422 = vadd.f32 %v222, %v405
        %v423 = vadd.f32 %v223, %v407
        %v424 = vmul.f32 %v416, 0.1229958
        %v425 = vmul.f32 %v417, 0.1229958
        %v426 = vmul.f32 %v418, 0.1229958
        %v427 = vmul.f32 %v419, 0.1229958
        %v428 = vmul.f32 %v420, 0.1229958
        %v429 = vmul.f32 %v421, 0.1229958
        %v430 = vmul.f32 %v422, 0.1229958
        %v431 = vmul.f32 %v423, 0.1229958
        %v432 = vmul.f32 %v216, 0.12801535
        %v433 = vmul.f32 %v217, 0.12801535
        %v434 = vmul.f32 %v218, 0.12801535
        %v435 = vmul.f32 %v219, 0.12801535
        %v436 = vmul.f32 %v220, 0.12801535
        %v437 = vmul.f32 %v221, 0.12801535
        %v438 = vmul.f32 %v222, 0.12801535
        %v439 = vmul.f32 %v223, 0.12801535
        %448 = vrot.lane.b32.xlu0 %v304, 127
        %v449 = vpop.permute.xlu0 %448
        %450 = vrot.lane.b32.xlu0 %v305, 127
        %v451 = vpop.permute.xlu0 %450
        %452 = vrot.lane.b32.xlu0 %v306, 127
        %v453 = vpop.permute.xlu0 %452
        %454 = vrot.lane.b32.xlu0 %v307, 127
        %v455 = vpop.permute.xlu0 %454
        %456 = vrot.lane.b32.xlu0 %v308, 127
        %v457 = vpop.permute.xlu0 %456
        %458 = vrot.lane.b32.xlu0 %v309, 127
        %v459 = vpop.permute.xlu0 %458
        %460 = vrot.lane.b32.xlu0 %v310, 127
        %v461 = vpop.permute.xlu0 %460
        %462 = vrot.lane.b32.xlu0 %v311, 127
        %v463 = vpop.permute.xlu0 %462
        %v472 = vadd.f32 %v264, %v449
        %v473 = vadd.f32 %v265, %v451
        %v474 = vadd.f32 %v266, %v453
        %v475 = vadd.f32 %v267, %v455
        %v476 = vadd.f32 %v268, %v457
        %v477 = vadd.f32 %v269, %v459
        %v478 = vadd.f32 %v270, %v461
        %v479 = vadd.f32 %v271, %v463
        %488 = vrot.lane.b32.xlu0 %v384, 127
        %v489 = vpop.permute.xlu0 %488
        %490 = vrot.lane.b32.xlu0 %v385, 127
        %v491 = vpop.permute.xlu0 %490
        %492 = vrot.lane.b32.xlu0 %v386, 127
        %v493 = vpop.permute.xlu0 %492
        %494 = vrot.lane.b32.xlu0 %v387, 127
        %v495 = vpop.permute.xlu0 %494
        %496 = vrot.lane.b32.xlu0 %v388, 127
        %v497 = vpop.permute.xlu0 %496
        %498 = vrot.lane.b32.xlu0 %v389, 127
        %v499 = vpop.permute.xlu0 %498
        %500 = vrot.lane.b32.xlu0 %v390, 127
        %v501 = vpop.permute.xlu0 %500
        %502 = vrot.lane.b32.xlu0 %v391, 127
        %v503 = vpop.permute.xlu0 %502
        %v512 = vadd.f32 %v344, %v489
        %v513 = vadd.f32 %v345, %v491
        %v514 = vadd.f32 %v346, %v493
        %v515 = vadd.f32 %v347, %v495
        %v516 = vadd.f32 %v348, %v497
        %v517 = vadd.f32 %v349, %v499
        %v518 = vadd.f32 %v350, %v501
        %v519 = vadd.f32 %v351, %v503
        %528 = vrot.lane.b32.xlu0 %v432, 127
        %v529 = vpop.permute.xlu0 %528
        %530 = vrot.lane.b32.xlu0 %v433, 127
        %v531 = vpop.permute.xlu0 %530
        %532 = vrot.lane.b32.xlu0 %v434, 127
        %v533 = vpop.permute.xlu0 %532
        %534 = vrot.lane.b32.xlu0 %v435, 127
        %v535 = vpop.permute.xlu0 %534
        %536 = vrot.lane.b32.xlu0 %v436, 127
        %v537 = vpop.permute.xlu0 %536
        %538 = vrot.lane.b32.xlu0 %v437, 127
        %v539 = vpop.permute.xlu0 %538
        %540 = vrot.lane.b32.xlu0 %v438, 127
        %v541 = vpop.permute.xlu0 %540
        %542 = vrot.lane.b32.xlu0 %v439, 127
        %v543 = vpop.permute.xlu0 %542
        %v552 = vadd.f32 %v424, %v529
        %v553 = vadd.f32 %v425, %v531
        %v554 = vadd.f32 %v426, %v533
        %v555 = vadd.f32 %v427, %v535
        %v556 = vadd.f32 %v428, %v537
        %v557 = vadd.f32 %v429, %v539
        %v558 = vadd.f32 %v430, %v541
        %v559 = vadd.f32 %v431, %v543
        %568 = vrot.lane.b32.xlu0 %v512, 126
        %v569 = vpop.permute.xlu0 %568
        %570 = vrot.lane.b32.xlu0 %v513, 126
        %v571 = vpop.permute.xlu0 %570
        %572 = vrot.lane.b32.xlu0 %v514, 126
        %v573 = vpop.permute.xlu0 %572
        %574 = vrot.lane.b32.xlu0 %v515, 126
        %v575 = vpop.permute.xlu0 %574
        %576 = vrot.lane.b32.xlu0 %v516, 126
        %v577 = vpop.permute.xlu0 %576
        %578 = vrot.lane.b32.xlu0 %v517, 126
        %v579 = vpop.permute.xlu0 %578
        %580 = vrot.lane.b32.xlu0 %v518, 126
        %v581 = vpop.permute.xlu0 %580
        %582 = vrot.lane.b32.xlu0 %v519, 126
        %v583 = vpop.permute.xlu0 %582
        %v592 = vadd.f32 %v472, %v569
        %v593 = vadd.f32 %v473, %v571
        %v594 = vadd.f32 %v474, %v573
        %v595 = vadd.f32 %v475, %v575
        %v596 = vadd.f32 %v476, %v577
        %v597 = vadd.f32 %v477, %v579
        %v598 = vadd.f32 %v478, %v581
        %v599 = vadd.f32 %v479, %v583
        %608 = vrot.lane.b32.xlu0 %v552, 124
        %v609 = vpop.permute.xlu0 %608
        %610 = vrot.lane.b32.xlu0 %v553, 124
        %v611 = vpop.permute.xlu0 %610
        %612 = vrot.lane.b32.xlu0 %v554, 124
        %v613 = vpop.permute.xlu0 %612
        %614 = vrot.lane.b32.xlu0 %v555, 124
        %v615 = vpop.permute.xlu0 %614
        %616 = vrot.lane.b32.xlu0 %v556, 124
        %v617 = vpop.permute.xlu0 %616
        %618 = vrot.lane.b32.xlu0 %v557, 124
        %v619 = vpop.permute.xlu0 %618
        %620 = vrot.lane.b32.xlu0 %v558, 124
        %v621 = vpop.permute.xlu0 %620
        %622 = vrot.lane.b32.xlu0 %v559, 124
        %v623 = vpop.permute.xlu0 %622
        %v632 = vadd.f32 %v592, %v609
        %v633 = vadd.f32 %v593, %v611
        %v634 = vadd.f32 %v594, %v613
        %v635 = vadd.f32 %v595, %v615
        %v636 = vadd.f32 %v596, %v617
        %v637 = vadd.f32 %v597, %v619
        %v638 = vadd.f32 %v598, %v621
        %v639 = vadd.f32 %v599, %v623
        %640 = vst.msk [vmem:[#allocation3 + $0x5] sm:$0xff] %vm198, %v632
        %641 = vst.msk [vmem:[#allocation3 + $0xd] sm:$0xff] %vm198, %v633
        %642 = vst.msk [vmem:[#allocation3 + $0x25] sm:$0xff] %vm198, %v634
        %643 = vst.msk [vmem:[#allocation3 + $0x2d] sm:$0xff] %vm198, %v635
        %644 = vst.msk [vmem:[#allocation3 + $0x45] sm:$0xff] %vm198, %v636
        %645 = vst.msk [vmem:[#allocation3 + $0x4d] sm:$0xff] %vm198, %v637
        %646 = vst.msk [vmem:[#allocation3 + $0x65] sm:$0xff] %vm198, %v638
        %647 = vst.msk [vmem:[#allocation3 + $0x6d] sm:$0xff] %vm198, %v639
        %v648 = vld [vmem:[#allocation3] sm:$0xff]
        %v649 = vld [vmem:[#allocation3 + $0x8] sm:$0xff]
        %v650 = vld [vmem:[#allocation3 + $0x20] sm:$0xff]
        %v651 = vld [vmem:[#allocation3 + $0x28] sm:$0xff]
        %v652 = vld [vmem:[#allocation3 + $0x40] sm:$0xff]
        %v653 = vld [vmem:[#allocation3 + $0x48] sm:$0xff]
        %v654 = vld [vmem:[#allocation3 + $0x60] sm:$0xff]
        %v655 = vld [vmem:[#allocation3 + $0x68] sm:$0xff]
        %v656 = vld [vmem:[#allocation3 + $0xa] sm:$0xff]
        %v657 = vld [vmem:[#allocation3 + $0x12] sm:$0xff]
        %v658 = vld [vmem:[#allocation3 + $0x2a] sm:$0xff]
        %v659 = vld [vmem:[#allocation3 + $0x32] sm:$0xff]
        %v660 = vld [vmem:[#allocation3 + $0x4a] sm:$0xff]
        %v661 = vld [vmem:[#allocation3 + $0x52] sm:$0xff]
        %v662 = vld [vmem:[#allocation3 + $0x6a] sm:$0xff]
        %v663 = vld [vmem:[#allocation3 + $0x72] sm:$0xff]
        %v664 = vadd.f32 %v648, %v656
        %v665 = vadd.f32 %v649, %v657
        %v666 = vadd.f32 %v650, %v658
        %v667 = vadd.f32 %v651, %v659
        %v668 = vadd.f32 %v652, %v660
        %v669 = vadd.f32 %v653, %v661
        %v670 = vadd.f32 %v654, %v662
        %v671 = vadd.f32 %v655, %v663
        %v672 = vmul.f32 %v664, 0.04709422
        %v673 = vmul.f32 %v665, 0.04709422
        %v674 = vmul.f32 %v666, 0.04709422
        %v675 = vmul.f32 %v667, 0.04709422
        %v676 = vmul.f32 %v668, 0.04709422
        %v677 = vmul.f32 %v669, 0.04709422
        %v678 = vmul.f32 %v670, 0.04709422
        %v679 = vmul.f32 %v671, 0.04709422
        %v680 = vld [vmem:[#allocation3 + $0x1] sm:$0xff]
        %v681 = vld [vmem:[#allocation3 + $0x9] sm:$0xff]
        %v682 = vld [vmem:[#allocation3 + $0x21] sm:$0xff]
        %v683 = vld [vmem:[#allocation3 + $0x29] sm:$0xff]
        %v684 = vld [vmem:[#allocation3 + $0x41] sm:$0xff]
        %v685 = vld [vmem:[#allocation3 + $0x49] sm:$0xff]
        %v686 = vld [vmem:[#allocation3 + $0x61] sm:$0xff]
        %v687 = vld [vmem:[#allocation3 + $0x69] sm:$0xff]
        %v688 = vld [vmem:[#allocation3 + $0x11] sm:$0xff]
        %v689 = vld [vmem:[#allocation3 + $0x31] sm:$0xff]
        %v690 = vld [vmem:[#allocation3 + $0x51] sm:$0xff]
        %v691 = vld [vmem:[#allocation3 + $0x71] sm:$0xff]
        %v692 = vadd.f32 %v680, %v681
        %v693 = vadd.f32 %v681, %v688
        %v694 = vadd.f32 %v682, %v683
        %v695 = vadd.f32 %v683, %v689
        %v696 = vadd.f32 %v684, %v685
        %v697 = vadd.f32 %v685, %v690
        %v698 = vadd.f32 %v686, %v687
        %v699 = vadd.f32 %v687, %v691
        %v700 = vmul.f32 %v692, 0.06750153
        %v701 = vmul.f32 %v693, 0.06750153
        %v702 = vmul.f32 %v694, 0.06750153
        %v703 = vmul.f32 %v695, 0.06750153
        %v704 = vmul.f32 %v696, 0.06750153
        %v705 = vmul.f32 %v697, 0.06750153
        %v706 = vmul.f32 %v698, 0.06750153
        %v707 = vmul.f32 %v699, 0.06750153
        %v708 = vld [vmem:[#allocation3 + $0x2] sm:$0xff]
        %v709 = vld [vmem:[#allocation3 + $0x22] sm:$0xff]
        %v710 = vld [vmem:[#allocation3 + $0x42] sm:$0xff]
        %v711 = vld [vmem:[#allocation3 + $0x62] sm:$0xff]
        %v712 = vld [vmem:[#allocation3 + $0x10] sm:$0xff]
        %v713 = vld [vmem:[#allocation3 + $0x30] sm:$0xff]
        %v714 = vld [vmem:[#allocation3 + $0x50] sm:$0xff]
        %v715 = vld [vmem:[#allocation3 + $0x70] sm:$0xff]
        %v716 = vadd.f32 %v708, %v649
        %v717 = vadd.f32 %v656, %v712
        %v718 = vadd.f32 %v709, %v651
        %v719 = vadd.f32 %v658, %v713
        %v720 = vadd.f32 %v710, %v653
        %v721 = vadd.f32 %v660, %v714
        %v722 = vadd.f32 %v711, %v655
        %v723 = vadd.f32 %v662, %v715
        %v724 = vmul.f32 %v716, 0.08931328
        %v725 = vmul.f32 %v717, 0.08931328
        %v726 = vmul.f32 %v718, 0.08931328
        %v727 = vmul.f32 %v719, 0.08931328
        %v728 = vmul.f32 %v720, 0.08931328
        %v729 = vmul.f32 %v721, 0.08931328
        %v730 = vmul.f32 %v722, 0.08931328
        %v731 = vmul.f32 %v723, 0.08931328
        %v732 = vld [vmem:[#allocation3 + $0x3] sm:$0xff]
        %v733 = vld [vmem:[#allocation3 + $0xb] sm:$0xff]
        %v734 = vld [vmem:[#allocation3 + $0x23] sm:$0xff]
        %v735 = vld [vmem:[#allocation3 + $0x2b] sm:$0xff]
        %v736 = vld [vmem:[#allocation3 + $0x43] sm:$0xff]
        %v737 = vld [vmem:[#allocation3 + $0x4b] sm:$0xff]
        %v738 = vld [vmem:[#allocation3 + $0x63] sm:$0xff]
        %v739 = vld [vmem:[#allocation3 + $0x6b] sm:$0xff]
        %v740 = vld [vmem:[#allocation3 + $0x7] sm:$0xff]
        %v741 = vld [vmem:[#allocation3 + $0xf] sm:$0xff]
        %v742 = vld [vmem:[#allocation3 + $0x27] sm:$0xff]
        %v743 = vld [vmem:[#allocation3 + $0x2f] sm:$0xff]
        %v744 = vld [vmem:[#allocation3 + $0x47] sm:$0xff]
        %v745 = vld [vmem:[#allocation3 + $0x4f] sm:$0xff]
        %v746 = vld [vmem:[#allocation3 + $0x67] sm:$0xff]
        %v747 = vld [vmem:[#allocation3 + $0x6f] sm:$0xff]
        %v748 = vadd.f32 %v732, %v740
        %v749 = vadd.f32 %v733, %v741
        %v750 = vadd.f32 %v734, %v742
        %v751 = vadd.f32 %v735, %v743
        %v752 = vadd.f32 %v736, %v744
        %v753 = vadd.f32 %v737, %v745
        %v754 = vadd.f32 %v738, %v746
        %v755 = vadd.f32 %v739, %v747
        %v756 = vmul.f32 %v748, 0.10908749
        %v757 = vmul.f32 %v749, 0.10908749
        %v758 = vmul.f32 %v750, 0.10908749
        %v759 = vmul.f32 %v751, 0.10908749
        %v760 = vmul.f32 %v752, 0.10908749
        %v761 = vmul.f32 %v753, 0.10908749
        %v762 = vmul.f32 %v754, 0.10908749
        %v763 = vmul.f32 %v755, 0.10908749
        %v764 = vld [vmem:[#allocation3 + $0x4] sm:$0xff]
        %v765 = vld [vmem:[#allocation3 + $0xc] sm:$0xff]
        %v766 = vld [vmem:[#allocation3 + $0x24] sm:$0xff]
        %v767 = vld [vmem:[#allocation3 + $0x2c] sm:$0xff]
        %v768 = vld [vmem:[#allocation3 + $0x44] sm:$0xff]
        %v769 = vld [vmem:[#allocation3 + $0x4c] sm:$0xff]
        %v770 = vld [vmem:[#allocation3 + $0x64] sm:$0xff]
        %v771 = vld [vmem:[#allocation3 + $0x6c] sm:$0xff]
        %v772 = vld [vmem:[#allocation3 + $0x6] sm:$0xff]
        %v773 = vld [vmem:[#allocation3 + $0xe] sm:$0xff]
        %v774 = vld [vmem:[#allocation3 + $0x26] sm:$0xff]
        %v775 = vld [vmem:[#allocation3 + $0x2e] sm:$0xff]
        %v776 = vld [vmem:[#allocation3 + $0x46] sm:$0xff]
        %v777 = vld [vmem:[#allocation3 + $0x4e] sm:$0xff]
        %v778 = vld [vmem:[#allocation3 + $0x66] sm:$0xff]
        %v779 = vld [vmem:[#allocation3 + $0x6e] sm:$0xff]
        %v780 = vadd.f32 %v764, %v772
        %v781 = vadd.f32 %v765, %v773
        %v782 = vadd.f32 %v766, %v774
        %v783 = vadd.f32 %v767, %v775
        %v784 = vadd.f32 %v768, %v776
        %v785 = vadd.f32 %v769, %v777
        %v786 = vadd.f32 %v770, %v778
        %v787 = vadd.f32 %v771, %v779
        %v788 = vmul.f32 %v780, 0.1229958
        %v789 = vmul.f32 %v781, 0.1229958
        %v790 = vmul.f32 %v782, 0.1229958
        %v791 = vmul.f32 %v783, 0.1229958
        %v792 = vmul.f32 %v784, 0.1229958
        %v793 = vmul.f32 %v785, 0.1229958
        %v794 = vmul.f32 %v786, 0.1229958
        %v795 = vmul.f32 %v787, 0.1229958
        %v796 = vld [vmem:[#allocation3 + $0x5] sm:$0xff]
        %v797 = vld [vmem:[#allocation3 + $0xd] sm:$0xff]
        %v798 = vld [vmem:[#allocation3 + $0x25] sm:$0xff]
        %v799 = vld [vmem:[#allocation3 + $0x2d] sm:$0xff]
        %v800 = vld [vmem:[#allocation3 + $0x45] sm:$0xff]
        %v801 = vld [vmem:[#allocation3 + $0x4d] sm:$0xff]
        %v802 = vld [vmem:[#allocation3 + $0x65] sm:$0xff]
        %v803 = vld [vmem:[#allocation3 + $0x6d] sm:$0xff]
        %v804 = vmul.f32 %v796, 0.12801535
        %v805 = vmul.f32 %v797, 0.12801535
        %v806 = vmul.f32 %v798, 0.12801535
        %v807 = vmul.f32 %v799, 0.12801535
        %v808 = vmul.f32 %v800, 0.12801535
        %v809 = vmul.f32 %v801, 0.12801535
        %v810 = vmul.f32 %v802, 0.12801535
        %v811 = vmul.f32 %v803, 0.12801535
        %v812 = vadd.f32 %v672, %v700
        %v813 = vadd.f32 %v673, %v701
        %v814 = vadd.f32 %v674, %v702
        %v815 = vadd.f32 %v675, %v703
        %v816 = vadd.f32 %v676, %v704
        %v817 = vadd.f32 %v677, %v705
        %v818 = vadd.f32 %v678, %v706
        %v819 = vadd.f32 %v679, %v707
        %v820 = vadd.f32 %v724, %v756
        %v821 = vadd.f32 %v725, %v757
        %v822 = vadd.f32 %v726, %v758
        %v823 = vadd.f32 %v727, %v759
        %v824 = vadd.f32 %v728, %v760
        %v825 = vadd.f32 %v729, %v761
        %v826 = vadd.f32 %v730, %v762
        %v827 = vadd.f32 %v731, %v763
        %v828 = vadd.f32 %v788, %v804
        %v829 = vadd.f32 %v789, %v805
        %v830 = vadd.f32 %v790, %v806
        %v831 = vadd.f32 %v791, %v807
        %v832 = vadd.f32 %v792, %v808
        %v833 = vadd.f32 %v793, %v809
        %v834 = vadd.f32 %v794, %v810
        %v835 = vadd.f32 %v795, %v811
        %v836 = vadd.f32 %v812, %v820
        %v837 = vadd.f32 %v813, %v821
        %v838 = vadd.f32 %v814, %v822
        %v839 = vadd.f32 %v815, %v823
        %v840 = vadd.f32 %v816, %v824
        %v841 = vadd.f32 %v817, %v825
        %v842 = vadd.f32 %v818, %v826
        %v843 = vadd.f32 %v819, %v827
        %v844 = vadd.f32 %v836, %v828
        %v845 = vadd.f32 %v837, %v829
        %v846 = vadd.f32 %v838, %v830
        %v847 = vadd.f32 %v839, %v831
        %v848 = vadd.f32 %v840, %v832
        %v849 = vadd.f32 %v841, %v833
        %v850 = vadd.f32 %v842, %v834
        %v851 = vadd.f32 %v843, %v835
        %852 = vst.msk [vmem:[%s137] sm:$0xff] %vm198, %v844
        %853 = vst.msk [vmem:[%s137 + $0x8] sm:$0xff] %vm198, %v845
        %854 = vst.msk [vmem:[%s137 + $0x10] sm:$0xff] %vm198, %v846
        %855 = vst.msk [vmem:[%s137 + $0x18] sm:$0xff] %vm198, %v847
        %856 = vst.msk [vmem:[%s137 + $0x20] sm:$0xff] %vm198, %v848
        %857 = vst.msk [vmem:[%s137 + $0x28] sm:$0xff] %vm198, %v849
        %858 = vst.msk [vmem:[%s137 + $0x30] sm:$0xff] %vm198, %v850
        %859 = vst.msk [vmem:[%s137 + $0x38] sm:$0xff] %vm198, %v851
        %s860 = sand.u32 %s52, 1
        %s861 = scalar_lea.sflag [#allocation6], %s860
        %s862 = sand.u32 %s52, 1
        %s863 = smul.addr %s862, 64
        %s864 = scalar_lea.vmem [#allocation7], %s863
        // Predicated region
        $region29: #{tpu_custom_call.1} parent=23 // pred_check
          %p865 = pneg %p62
        $region30: #{tpu_custom_call.1} parent=23 // pred_check_branch
          %867 = sbr.rel (%p865) target = $region32
        $region31: #{tpu_custom_call.1} parent=23 // pred_region
          %s868 = smul.u32 4, %s18
          %870 = vsyncadd %s861, 0
          %s871 = smul.addr %s868, 2
          %s872 = smul.addr %s871, 8
          %s873 = scalar_lea.hbm %s1, %s872
          %s874 = sshll.u32 %s864, 4
          %s875 = int_to_ptr.vmem [resolvable:$true] %s874
          %s876 = sshll.u32 %s873, 4
          %s877 = int_to_ptr.hbm [resolvable:$true] %s876
          %882 = dma.vmem_to_hbm [thread:$0]  %s875, 1024, %s877, %s861, 128, 128, 8
        $region32: #{tpu_custom_call.1} parent=23 // pred_fallthru
          _
      $region24: #{tpu_custom_call.1} parent=5 // pred_fallthru
        _
      %p883 = scmp.le.s32.totalorder 2, %s13
      // Predicated region
      $region33: #{tpu_custom_call.1} parent=5 // pred_check
        %p884 = pneg %p883
      $region34: #{tpu_custom_call.1} parent=5 // pred_check_branch
        %886 = sbr.rel (%p884) target = $region36
      $region35: #{tpu_custom_call.1} parent=5 // pred_region
        %s887 = ssub.s32 %s13, 2
        // Predicated region
        $region37: #{tpu_custom_call.1} parent=35 // pred_check
          %p888 = pneg %p68
        $region38: #{tpu_custom_call.1} parent=35 // pred_check_branch
          %890 = sbr.rel (%p888) target = $region40
        $region39: #{tpu_custom_call.1} parent=35 // pred_region
          %s891 = sand.u32 %s53, 1
          %s892 = scalar_lea.sflag [#allocation6], %s891
          %s893 = sand.u32 %s53, 1
          %s894 = smul.addr %s893, 64
          %s895 = scalar_lea.vmem [#allocation7], %s894
          %897 = dma.done %s892, 1024
        $region40: #{tpu_custom_call.1} parent=35 // pred_fallthru
          _
      $region36: #{tpu_custom_call.1} parent=5 // pred_fallthru
        _
    $region6: #{tpu_custom_call.1} parent=1 // loop_footer
      %s17 = sadd.s32 1, %s13
    $region7: #{tpu_custom_call.1} parent=1 // loop_footer_branch
      %12 = sbr.rel target = $region3
    $region8: #{tpu_custom_call.1} parent=1 // loop_exit
      _
    %898 = vsyncpa [#allocation5], 1
    %s899 = scalar_lea.sflag [#allocation5], 1
    %900 = vsyncpa %s899, 1
    %901 = vsyncpa [#allocation6], 1
    %s902 = scalar_lea.sflag [#allocation6], 1
    %903 = vsyncpa %s902, 1

</llo_original>
